<compile_context>
chip_gen: v7x
topology: tpu7x:2x2x1
jax: 0.10.0
libtpu: 0.0.40
codegen_flags: <defaults>
</compile_context>

<pallas_src>
import jax
import jax.numpy as jnp
from jax import lax
from jax.experimental import pallas as pl
from jax.experimental.pallas import tpu as pltpu


# ---------------------------------------------------------------------------
# Small helpers.
# ---------------------------------------------------------------------------
def _spec(block_shape, index_map, *, buffers=None):
    """BlockSpec with an optional explicit pipeline depth.

    buffers=1 single-buffers constant-index weight streams (their index map
    never changes, so double-buffering them is pure VMEM waste).  Falls back
    to the default pipelining if this JAX build has no per-spec pipeline_mode.
    """
    if buffers is not None and hasattr(pl, "Buffered"):
        try:
            return pl.BlockSpec(block_shape, index_map,
                                pipeline_mode=pl.Buffered(buffers))
        except TypeError:
            pass
    return pl.BlockSpec(block_shape, index_map)


def _largest_divisor_at_most(n, cap):
    cap = max(1, min(n, cap))
    for t in range(cap, 0, -1):
        if n % t == 0:
            return t
    return 1


def _vmem_capacity_bytes():
    # Conservative fallback = v7x per-TC VMEM so a failed query never produces
    # a limit above any generation's physical capacity.
    cap = 64 * 1024 * 1024
    try:
        cap = int(pltpu.get_tpu_info().vmem_capacity_bytes)
    except Exception:
        pass
    return cap


# ---------------------------------------------------------------------------
# Kernel 1: fc + l2norm over the region axis.
# ---------------------------------------------------------------------------
def _fc_kernel(img_ref, fcw_ref, fcb_ref, v0_ref):
    tb, n, d = img_ref.shape
    e = fcw_ref.shape[1]
    x = img_ref[...].reshape(tb * n, d)
    v0 = jnp.dot(x.astype(fcw_ref.dtype), fcw_ref[...],
                 preferred_element_type=jnp.float32) + fcb_ref[...]
    v0 = v0.reshape(tb, n, e)
    # l2norm over dim=1 (regions), matching the PyTorch l2norm on (B,N,E).
    v0_ref[...] = v0 * lax.rsqrt(jnp.sum(v0 * v0, axis=1, keepdims=True))


# ---------------------------------------------------------------------------
# Kernel 2: 4 stacked Rs_GCN (non-local) blocks + final l2norm.
# ---------------------------------------------------------------------------
def _gcn_kernel(v0_ref, wgtp_ref, bgtp_ref, wc_ref, bc_ref, gcn_ref):
    s = pl.program_id(1)
    n_stages = pl.num_programs(1)
    tb, n, e = v0_ref.shape
    cdt = wgtp_ref.dtype                      # compute dtype of MXU operands

    @pl.when(s == 0)
    def _init():
        gcn_ref[...] = v0_ref[...]

    v = gcn_ref[...]                          # (TB, N, E) carried across stages
    vm = v.reshape(tb * n, e)

    # Fused [g | theta/N | phi] projection: one (TB*N, E) x (E, 3E) matmul.
    # (If VMEM gets tight on v7x, the three projections could be emitted into
    # a pre-shaped scratch instead of slicing this one big value.)
    gtp = jnp.dot(vm.astype(cdt), wgtp_ref[...],
                  preferred_element_type=jnp.float32) + bgtp_ref[...]
    g_v = gtp[:, :e].reshape(tb, n, e).astype(cdt)
    th_v = gtp[:, e:2 * e].reshape(tb, n, e).astype(cdt)
    ph_v = gtp[:, 2 * e:].reshape(tb, n, e).astype(cdt)

    # Per-batch-element non-local attention (1/N already folded into theta),
    # run as bf16 MXU passes with fp32 accumulation.
    r = jnp.einsum("bnf,bmf->bnm", th_v, ph_v,
                   preferred_element_type=jnp.float32)
    y = jnp.einsum("bnm,bmf->bnf", r.astype(cdt), g_v,
                   preferred_element_type=jnp.float32)

    # W conv (eval-mode BatchNorm folded into weight/bias) + residual.
    wy = jnp.dot(y.reshape(tb * n, e).astype(cdt), wc_ref[...],
                 preferred_element_type=jnp.float32) + bc_ref[...]
    v_new = wy.reshape(tb, n, e) + v

    @pl.when(s < n_stages - 1)
    def _carry():
        gcn_ref[...] = v_new

    @pl.when(s == n_stages - 1)
    def _finalize():
        gcn_ref[...] = v_new * lax.rsqrt(
            jnp.sum(v_new * v_new, axis=1, keepdims=True))


# ---------------------------------------------------------------------------
# Kernel 3: gate-fused GRU input projection, emitted time-major (N, B, 3E).
# ---------------------------------------------------------------------------
def _xp_kernel(gcn_ref, wih_ref, bih_ref, xp_ref):
    tb, n, e = gcn_ref.shape
    x = gcn_ref[...].reshape(tb * n, e)
    xp = jnp.dot(x.astype(wih_ref.dtype), wih_ref[...],
                 preferred_element_type=jnp.float32) + bih_ref[...]
    xp = xp.reshape(tb, n, 3 * e).astype(xp_ref.dtype)
    # Batch-major -> time-major with N static slice-stores: one up-front
    # reorder here replaces the per-timestep sublane gather that used to sit
    # inside the GRU recurrence.
    for t in range(n):
        xp_ref[t, :, :] = xp[:, t, :]


# ---------------------------------------------------------------------------
# Kernel 4: GRU recurrence over the streamed time axis + l2norm of h_final.
# ---------------------------------------------------------------------------
def _gru_kernel(xp_ref, whh_ref, bhh_ref, feat_ref, h_ref):
    t = pl.program_id(1)
    e = whh_ref.shape[0]

    @pl.when(t == 0)
    def _init():
        h_ref[...] = jnp.zeros_like(h_ref)

    h = h_ref[...]                                     # (TBg, E) fp32 carry
    xp = xp_ref[...].astype(jnp.float32)               # (TBg, 3E) streamed slab
    hp = jnp.dot(h.astype(whh_ref.dtype), whh_ref[...],
                 preferred_element_type=jnp.float32) + bhh_ref[...]
    r = jax.nn.sigmoid(xp[:, :e] + hp[:, :e])
    z = jax.nn.sigmoid(xp[:, e:2 * e] + hp[:, e:2 * e])
    c = jnp.tanh(xp[:, 2 * e:] + r * hp[:, 2 * e:])
    h_new = (1.0 - z) * c + z * h
    h_ref[...] = h_new

    @pl.when(t == pl.num_programs(1) - 1)
    def _finalize():
        # features = l2norm(hidden_state[0]) over the embedding dim.
        feat_ref[...] = h_new * lax.rsqrt(
            jnp.sum(h_new * h_new, axis=1, keepdims=True))


# ---------------------------------------------------------------------------
# Host-side parameter prep: fold / fuse / pre-transpose + bf16 cast.
# ---------------------------------------------------------------------------
def prepare_params(p, n_regions, weights_dtype=jnp.bfloat16):
    e = p["fc_w"].shape[0]
    wd = weights_dtype
    f32 = jnp.float32

    fc_wt = p["fc_w"].T.astype(wd)                                     # (D, E)
    fc_b = p["fc_b"].reshape(1, e).astype(f32)

    # Fused [g | theta | phi] per stage, pre-transposed so the kernel does
    # x @ W; the 1/N attention scale is folded into theta's weight and bias.
    gtp_w = jnp.concatenate(
        [jnp.transpose(p["g_w"], (0, 2, 1)),
         jnp.transpose(p["t_w"], (0, 2, 1)) / n_regions,
         jnp.transpose(p["p_w"], (0, 2, 1))], axis=2).astype(wd)       # (4,E,3E)
    gtp_b = jnp.concatenate(
        [p["g_b"], p["t_b"] / n_regions, p["p_b"]],
        axis=1)[:, None, :].astype(f32)                                # (4,1,3E)

    # W conv with eval-mode BatchNorm scale/shift folded in.
    c_wt = (jnp.transpose(p["c_w"], (0, 2, 1)) *
            p["bn_s"][:, None, :]).astype(wd)                          # (4,E,E)
    c_b = (p["c_b"] * p["bn_s"] + p["bn_b"])[:, None, :].astype(f32)   # (4,1,E)

    # GRU: fuse the three gate matrices [r|z|n] into one (E,3E) each (pre-T).
    w_ih = p["w_ih"].reshape(3 * e, e).T.astype(wd)                    # (E, 3E)
    w_hh = p["w_hh"].reshape(3 * e, e).T.astype(wd)
    b_ih = p["b_ih"].reshape(1, 3 * e).astype(f32)
    b_hh = p["b_hh"].reshape(1, 3 * e).astype(f32)

    return dict(fc_wt=fc_wt, fc_b=fc_b, gtp_w=gtp_w, gtp_b=gtp_b,
                c_wt=c_wt, c_b=c_b, w_ih=w_ih, b_ih=b_ih,
                w_hh=w_hh, b_hh=b_hh)


def encoder_image_precomp_attn(images, params, *, batch_tile=None,
                               gru_batch_tile=None,
                               weights_dtype=jnp.bfloat16):
    b, n, d = images.shape
    e = params["fc_w"].shape[0]
    n_stages = 4

    if batch_tile is None:
        # 16-32 rows amortize the per-stage weight stream; keep >=2 tiles when
        # the batch allows so both v7x TensorCores get GCN work.
        batch_tile = _largest_divisor_at_most(b, b if b <= 8 else min(32, b // 2))
    if gru_batch_tile is None:
        # M of the per-timestep h @ W_hh matmul: push it toward 128-256 so MXU
        # weight pushes are amortized over many batch rows.
        gru_batch_tile = _largest_divisor_at_most(b, 256)
    tb, tbg = batch_tile, gru_batch_tile
    assert b % tb == 0 and b % tbg == 0, "batch must divide the batch tiles"
    # TODO(synk): pad the region axis to a sublane multiple to support
    # N % 8 != 0 (e.g. VSRN's 36 regions); the GRU trip count must then come
    # from the true N, since padded zero timesteps still move h via the biases.
    assert n % 8 == 0, "num regions must be a multiple of 8"

    pp = prepare_params(params, n, weights_dtype)

    vmem_cap = _vmem_capacity_bytes()
    vmem_limit = min(int(vmem_cap * 0.85), 112 * 1024 * 1024)
    # Single-buffer the streamed per-stage GCN weights only where VMEM is
    # scarce (v7x 64 MiB); elsewhere keep default double-buffering for overlap.
    stage_bufs = 1 if vmem_cap < 96 * 1024 * 1024 else None

    def cparams(sem):
        return pltpu.CompilerParams(dimension_semantics=sem,
                                    vmem_limit_bytes=vmem_limit)

    # 1) fc + first l2norm. ---------------------------------------------------
    v0 = pl.pallas_call(
        _fc_kernel,
        grid=(b // tb,),
        in_specs=[
            pl.BlockSpec((tb, n, d), lambda i: (i, 0, 0)),             # images
            _spec((d, e), lambda i: (0, 0), buffers=1),                # fc W^T
            _spec((1, e), lambda i: (0, 0), buffers=1),                # fc bias
        ],
        out_specs=pl.BlockSpec((tb, n, e), lambda i: (i, 0, 0)),
        out_shape=jax.ShapeDtypeStruct((b, n, e), jnp.float32),
        compiler_params=cparams(("parallel",)),
    )(images, pp["fc_wt"], pp["fc_b"])

    # 2) 4 stacked Rs_GCN stages (batch tiles x streamed stage axis). ---------
    gcn = pl.pallas_call(
        _gcn_kernel,
        grid=(b // tb, n_stages),
        in_specs=[
            pl.BlockSpec((tb, n, e), lambda i, s: (i, 0, 0)),          # v0
            _spec((None, e, 3 * e), lambda i, s: (s, 0, 0),
                  buffers=stage_bufs),                                 # g|t|p W
            _spec((None, 1, 3 * e), lambda i, s: (s, 0, 0),
                  buffers=stage_bufs),                                 # g|t|p b
            _spec((None, e, e), lambda i, s: (s, 0, 0),
                  buffers=stage_bufs),                                 # Wc(+BN)
            _spec((None, 1, e), lambda i, s: (s, 0, 0),
                  buffers=stage_bufs),                                 # bc(+BN)
        ],
        out_specs=pl.BlockSpec((tb, n, e), lambda i, s: (i, 0, 0)),
        out_shape=jax.ShapeDtypeStruct((b, n, e), jnp.float32),
        compiler_params=cparams(("parallel", "arbitrary")),
    )(v0, pp["gtp_w"], pp["gtp_b"], pp["c_wt"], pp["c_b"])

    # 3) Hoisted gate-fused GRU input projection, time-major (N, B, 3E). ------
    xp = pl.pallas_call(
        _xp_kernel,
        grid=(b // tb,),
        in_specs=[
            pl.BlockSpec((tb, n, e), lambda i: (i, 0, 0)),             # GCN emb
            _spec((e, 3 * e), lambda i: (0, 0), buffers=1),            # W_ih^T
            _spec((1, 3 * e), lambda i: (0, 0), buffers=1),            # b_ih
        ],
        out_specs=pl.BlockSpec((n, tb, 3 * e), lambda i: (0, i, 0)),
        out_shape=jax.ShapeDtypeStruct((n, b, 3 * e), weights_dtype),
        compiler_params=cparams(("parallel",)),
    )(gcn, pp["w_ih"], pp["b_ih"])

    # 4) GRU recurrence: batch tiles x streamed timestep axis. ----------------
    feat = pl.pallas_call(
        _gru_kernel,
        grid=(b // tbg, n),
        in_specs=[
            pl.BlockSpec((None, tbg, 3 * e), lambda i, t: (t, i, 0)),  # xp slab
            _spec((e, 3 * e), lambda i, t: (0, 0), buffers=1),         # W_hh^T
            _spec((1, 3 * e), lambda i, t: (0, 0), buffers=1),         # b_hh
        ],
        out_specs=pl.BlockSpec((tbg, e), lambda i, t: (i, 0)),
        out_shape=jax.ShapeDtypeStruct((b, e), jnp.float32),
        scratch_shapes=[pltpu.VMEM((tbg, e), jnp.float32)],            # h carry
        compiler_params=cparams(("parallel", "arbitrary")),
    )(xp, pp["w_hh"], pp["b_hh"])

    return feat, gcn


# ---------------------------------------------------------------------------
# Plain-JAX mirror of the PyTorch forward (for correctness checks).
# ---------------------------------------------------------------------------
def reference_forward(images, p):
    B, N, D = images.shape
    E = p["fc_w"].shape[0]
    v = jnp.einsum("bnd,ed->bne", images, p["fc_w"]) + p["fc_b"]
    v = v / jnp.sqrt(jnp.sum(v * v, axis=1, keepdims=True))       # l2norm dim=1
    for i in range(4):
        g = jnp.einsum("bne,fe->bnf", v, p["g_w"][i]) + p["g_b"][i]
        th = jnp.einsum("bne,fe->bnf", v, p["t_w"][i]) + p["t_b"][i]
        ph = jnp.einsum("bne,fe->bnf", v, p["p_w"][i]) + p["p_b"][i]
        R = jnp.einsum("bnf,bmf->bnm", th, ph) / N
        y = jnp.einsum("bnm,bmf->bnf", R, g)
        wy = jnp.einsum("bnf,ef->bne", y, p["c_w"][i]) + p["c_b"][i]
        wy = wy * p["bn_s"][i] + p["bn_b"][i]
        v = wy + v
    v = v / jnp.sqrt(jnp.sum(v * v, axis=1, keepdims=True))
    gcn = v
    h = jnp.zeros((B, E), jnp.float32)
    for t in range(N):
        xt = v[:, t, :]
        r = jax.nn.sigmoid(xt @ p["w_ih"][0].T + p["b_ih"][0]
                           + h @ p["w_hh"][0].T + p["b_hh"][0])
        z = jax.nn.sigmoid(xt @ p["w_ih"][1].T + p["b_ih"][1]
                           + h @ p["w_hh"][1].T + p["b_hh"][1])
        c = jnp.tanh(xt @ p["w_ih"][2].T + p["b_ih"][2]
                     + r * (h @ p["w_hh"][2].T + p["b_hh"][2]))
        h = (1.0 - z) * c + z * h
    feat = h / jnp.sqrt(jnp.sum(h * h, axis=1, keepdims=True))
    return feat, gcn


def init_params(key, img_dim, embed_size):
    D, E = img_dim, embed_size
    ks = jax.random.split(key, 20)
    r = jnp.sqrt(6.0) / jnp.sqrt(D + E)     # Xavier range as in init_weights()
    u = lambda k, shape, s: jax.random.uniform(k, shape, jnp.float32, -s, s)
    return {
        "fc_w": u(ks[0], (E, D), r),
        "fc_b": jnp.zeros((1, E), jnp.float32),
        # 4 Rs_GCN blocks, params stacked along dim 0 (Conv1d k=1 == matmul).
        "g_w": u(ks[1], (4, E, E), 0.1), "g_b": u(ks[2], (4, E), 0.1),
        "t_w": u(ks[3], (4, E, E), 0.1), "t_b": u(ks[4], (4, E), 0.1),
        "p_w": u(ks[5], (4, E, E), 0.1), "p_b": u(ks[6], (4, E), 0.1),
        "c_w": u(ks[7], (4, E, E), 0.1), "c_b": u(ks[8], (4, E), 0.1),
        # eval-mode BatchNorm1d folded into scale/shift (synthetic stats).
        "bn_s": 1.0 + u(ks[9], (4, E), 0.1),
        "bn_b": u(ks[10], (4, E), 0.1),
        # GRU params, gate order [r, z, n]; each (3, E, E) / (3, E).
        "w_ih": u(ks[11], (3, E, E), 0.2),
        "w_hh": u(ks[12], (3, E, E), 0.2),
        "b_ih": u(ks[13], (3, E), 0.2),
        "b_hh": u(ks[14], (3, E), 0.2),
    }


if __name__ == "__main__":
    B, N, D, E = 4, 8, 16, 32          # batch, regions, img_dim, embed_size
    key = jax.random.PRNGKey(0)
    k_img, k_par = jax.random.split(key)
    images = jax.random.normal(k_img, (B, N, D), jnp.float32)
    params = init_params(k_par, D, E)

    feat_ref, gcn_ref = reference_forward(images, params)

    # Exact-precision path (fp32 weights): tight check against the reference.
    feat32, gcn32 = encoder_image_precomp_attn(
        images, params, batch_tile=2, gru_batch_tile=4,
        weights_dtype=jnp.float32)
    feat32, gcn32 = jax.block_until_ready((feat32, gcn32))
    assert feat32.shape == (B, E) and gcn32.shape == (B, N, E)
    assert jnp.allclose(feat32, feat_ref, rtol=1e-4, atol=1e-4), "features mismatch"
    assert jnp.allclose(gcn32, gcn_ref, rtol=1e-4, atol=1e-4), "GCN_img_emd mismatch"

    # Default bf16-weight path (auto tiles, halved weight DMA): loose check.
    feat16, gcn16 = encoder_image_precomp_attn(images, params)
    feat16, gcn16 = jax.block_until_ready((feat16, gcn16))
    assert float(jnp.max(jnp.abs(feat16 - feat_ref))) < 0.1, "bf16 features drift"
    assert float(jnp.max(jnp.abs(gcn16 - gcn_ref))) < 0.1, "bf16 GCN drift"

    print("KERNEL_OK")
</pallas_src>

<mosaic_0001>
module attributes {stable_mosaic.version = 11 : i64} {
  func.func @_fc_kernel(%arg0: i32, %arg1: memref<2x8x16xf32, #tpu.memory_space<vmem>>, %arg2: memref<16x32xf32, #tpu.memory_space<vmem>>, %arg3: memref<1x32xf32, #tpu.memory_space<vmem>>, %arg4: memref<2x8x32xf32, #tpu.memory_space<vmem>>) attributes {dimension_semantics = [#tpu.dimension_semantics<parallel>], iteration_bounds = array<i64: 2>, scalar_prefetch = 0 : i64, scratch_operands = 0 : i64, tpu.core_type = #tpu.core_type<tc>, window_params = [{transform_indices = @transform_0, window_bounds = array<i64: 2, 8, 16>}, {pipeline_mode = #tpu.pipeline_mode<synchronous>, transform_indices = @transform_1, window_bounds = array<i64: 16, 32>}, {pipeline_mode = #tpu.pipeline_mode<synchronous>, transform_indices = @transform_2, window_bounds = array<i64: 1, 32>}, {transform_indices = @transform_3, window_bounds = array<i64: 2, 8, 32>}]} {
    %c0 = arith.constant 0 : index
    %c0_0 = arith.constant 0 : index
    %c0_1 = arith.constant 0 : index
    %0 = vector.load %arg1[%c0, %c0_0, %c0_1] : memref<2x8x16xf32, #tpu.memory_space<vmem>>, vector<2x8x16xf32>
    %1 = vector.shape_cast %0 : vector<2x8x16xf32> to vector<16x16xf32>
    %c0_2 = arith.constant 0 : index
    %c0_3 = arith.constant 0 : index
    %2 = vector.load %arg2[%c0_2, %c0_3] : memref<16x32xf32, #tpu.memory_space<vmem>>, vector<16x32xf32>
    %cst = arith.constant dense<0.000000e+00> : vector<16x32xf32>
    %3 = tpu.matmul %1, %2, %cst {dimension_numbers = #tpu.dot_dimension_numbers<[1], [0], [0], [1], [0, 0, 1, 1], [], []>} : vector<16x16xf32>, vector<16x32xf32>, vector<16x32xf32> -> vector<16x32xf32>
    %c0_4 = arith.constant 0 : index
    %c0_5 = arith.constant 0 : index
    %4 = vector.load %arg3[%c0_4, %c0_5] : memref<1x32xf32, #tpu.memory_space<vmem>>, vector<1x32xf32>
    %5 = vector.broadcast %4 : vector<1x32xf32> to vector<16x32xf32>
    %6 = arith.addf %3, %5 : vector<16x32xf32>
    %7 = vector.shape_cast %6 : vector<16x32xf32> to vector<2x8x32xf32>
    %8 = arith.mulf %7, %7 : vector<2x8x32xf32>
    %cst_6 = arith.constant dense<0.000000e+00> : vector<2x32xf32>
    %9 = vector.multi_reduction <add>, %8, %cst_6 [1] : vector<2x8x32xf32> to vector<2x32xf32>
    %10 = vector.shape_cast %9 : vector<2x32xf32> to vector<2x1x32xf32>
    %11 = math.rsqrt %10 : vector<2x1x32xf32>
    %12 = vector.broadcast %11 : vector<2x1x32xf32> to vector<2x8x32xf32>
    %13 = arith.mulf %7, %12 : vector<2x8x32xf32>
    %c0_7 = arith.constant 0 : index
    %c0_8 = arith.constant 0 : index
    %c0_9 = arith.constant 0 : index
    %14 = vector.load %arg4[%c0_7, %c0_8, %c0_9] : memref<2x8x32xf32, #tpu.memory_space<vmem>>, vector<2x8x32xf32>
    tpu.vector_store %arg4[%c0_7, %c0_8, %c0_9], %13 {strides = array<i32>} : memref<2x8x32xf32, #tpu.memory_space<vmem>>, vector<2x8x32xf32>,
    return
  }
  func.func @transform_0(%arg0: i32) -> (i32, i32, i32) {
    %c0_i32 = arith.constant 0 : i32
    %c0_i32_0 = arith.constant 0 : i32
    %c0_i32_1 = arith.constant 0 : i32
    return %arg0, %c0_i32, %c0_i32_0 : i32, i32, i32
  }
  func.func @transform_1(%arg0: i32) -> (i32, i32) {
    %c0_i32 = arith.constant 0 : i32
    %c0_i32_0 = arith.constant 0 : i32
    %c0_i32_1 = arith.constant 0 : i32
    return %c0_i32, %c0_i32_0 : i32, i32
  }
  func.func @transform_2(%arg0: i32) -> (i32, i32) {
    %c0_i32 = arith.constant 0 : i32
    %c0_i32_0 = arith.constant 0 : i32
    %c0_i32_1 = arith.constant 0 : i32
    return %c0_i32, %c0_i32_0 : i32, i32
  }
  func.func @transform_3(%arg0: i32) -> (i32, i32, i32) {
    %c0_i32 = arith.constant 0 : i32
    %c0_i32_0 = arith.constant 0 : i32
    %c0_i32_1 = arith.constant 0 : i32
    return %arg0, %c0_i32, %c0_i32_0 : i32, i32, i32
  }
}

</mosaic_0001>

<llo_original>
// kernel: tpu_custom_call.1
$region0: #{tpu_custom_call.1}
  #allocation0 [shape = 'u32[]', space=smem, size = 0x4, offset = 0x4, fixed_abs, tag = 'smem constant byte address 0x4 - core index']
  #allocation1 [shape = 'u32[144,128]{1,0:T(1,128)}', space=vmem, size = 0x12000, scoped, tag = 'internal scratch']
  %s0 = inlined_call_operand.hbm [shape: f32[4,8,16], index: 0, kind: input, shape index: {}]
  %s1 = inlined_call_operand.hbm [shape: f32[16,32], index: 1, kind: input, shape index: {}]
  %s2 = inlined_call_operand.vmem [shape: f32[1,32], index: 2, kind: input, shape index: {}]
  %s3 = inlined_call_operand.hbm [shape: f32[4,8,32], index: 3, kind: output, shape index: {}]
  %s4 = sld [smem:[#allocation0]]
  $region53: #{tpu_custom_call.1} parent=0
    _
  %s6 = ssub.s32 1, %s4
  %s7 = scalar_select 0, %s6, %s4
  $region1: #{tpu_custom_call.1} parent=0
    #allocation2 [shape = 'u8[16384]{0}', space=vmem, size = 0x4000, scoped, tag = 'input window, operand 0']
    #allocation3 [shape = 's32[2]{0}', space=sflag, size = 0x8, scoped, tag = 'scoped memory for tpu_custom_call.1']
    #allocation4 [shape = 's32[2]{0}', space=sflag, size = 0x8, scoped, tag = 'scoped memory for tpu_custom_call.1']
    #allocation5 [shape = 'u8[8192]{0}', space=vmem, size = 0x2000, scoped, tag = 'input window, operand 1, single buffered']
    #allocation6 [shape = 's32[1]{0}', space=sflag, size = 0x4, scoped, tag = 'scoped memory for tpu_custom_call.1']
    #allocation7 [shape = 'u8[16384]{0}', space=vmem, size = 0x4000, scoped, tag = 'output window, operand 0']
    %8 = vsyncpa [#allocation3], 0
    %s9 = scalar_lea.sflag [#allocation3], 1
    %10 = vsyncpa %s9, 0
    %11 = vsyncpa [#allocation6], 0
    %12 = vsyncpa [#allocation4], 0
    %s13 = scalar_lea.sflag [#allocation4], 1
    %14 = vsyncpa %s13, 0
    loop: start=0, step=1, limit=4
    $region2: #{tpu_custom_call.1} parent=1 // loop_pre_header
      _
    $region3: #{tpu_custom_call.1} parent=1 // loop_header
      %s16 = sphi 0, %s20
      %p17 = scmp.ge.s32.totalorder %s16, 4
      %s26 = sphi 0, %s28
      %s29 = sphi 0, %s26
      %s30 = sphi 0, %s29
      %s46 = sphi 0, %s30
      %s50 = sphi 0, %s50
      %s52 = sphi 0, %s50
      %s53 = sphi 0, %s52
      %s67 = sphi 0, %s53
      %s71 = sphi 0, %s71
      %s73 = sphi 0, %s71
      %s74 = sphi 0, %s73
      %s88 = sphi 0, %s74
      %s94 = sphi 0, %s96
      %s97 = sphi 0, %s94
      %s98 = sphi 0, %s97
      %s114 = sphi 0, %s98
    $region4: #{tpu_custom_call.1} parent=1 // loop_header_branch
      %19 = sbr.rel (%p17) target = $region8
    $region5: #{tpu_custom_call.1} parent=1 // loop_body
      %s21 = ssub.s32 %s16, 1
      %s22 = ssub.s32 %s16, 2
      %s23 = sadd.s32 %s16, 1
      %s24 = ssub.s32 %s16, %s23
      %p25 = scmp.eq.s32.totalorder %s24, 0
      %s27 = sadd.s32 %s26, 1
      %s28 = scalar_select %p25, %s26, %s27
      %p31 = pneg %p25
      %p32 = scmp.eq.s32.totalorder %s16, 1
      %p33 = por %p31, %p32
      %p34 = scmp.ne.s32.totalorder %s26, %s29
      %p35 = scmp.eq.s32.totalorder %s16, 0
      %p36 = por %p34, %p35
      %p37 = scmp.ne.s32.totalorder %s26, %s29
      %p38 = scmp.eq.s32.totalorder %s21, 1
      %p39 = por %p37, %p38
      %p40 = scmp.ne.s32.totalorder %s29, %s30
      %p41 = scmp.eq.s32.totalorder %s21, 0
      %p42 = por %p40, %p41
      %p43 = scmp.ne.s32.totalorder %s29, %s30
      %p44 = scmp.eq.s32.totalorder %s22, 1
      %p45 = por %p43, %p44
      %p47 = scmp.ne.s32.totalorder %s30, %s46
      %p48 = scmp.eq.s32.totalorder %s22, 0
      %p49 = por %p47, %p48
      %s51 = sadd.s32 %s50, 1
      %p54 = scmp.eq.s32.totalorder %s16, 1
      %p55 = scmp.ne.s32.totalorder %s50, %s52
      %p56 = scmp.eq.s32.totalorder %s16, 0
      %p57 = por %p55, %p56
      %p58 = scmp.ne.s32.totalorder %s50, %s52
      %p59 = scmp.eq.s32.totalorder %s21, 1
      %p60 = por %p58, %p59
      %p61 = scmp.ne.s32.totalorder %s52, %s53
      %p62 = scmp.eq.s32.totalorder %s21, 0
      %p63 = por %p61, %p62
      %p64 = scmp.ne.s32.totalorder %s52, %s53
      %p65 = scmp.eq.s32.totalorder %s22, 1
      %p66 = por %p64, %p65
      %p68 = scmp.ne.s32.totalorder %s53, %s67
      %p69 = scmp.eq.s32.totalorder %s22, 0
      %p70 = por %p68, %p69
      %s72 = sadd.s32 %s71, 1
      %p75 = scmp.eq.s32.totalorder %s16, 1
      %p76 = scmp.ne.s32.totalorder %s71, %s73
      %p77 = scmp.eq.s32.totalorder %s16, 0
      %p78 = por %p76, %p77
      %p79 = scmp.ne.s32.totalorder %s71, %s73
      %p80 = scmp.eq.s32.totalorder %s21, 1
      %p81 = por %p79, %p80
      %p82 = scmp.ne.s32.totalorder %s73, %s74
      %p83 = scmp.eq.s32.totalorder %s21, 0
      %p84 = por %p82, %p83
      %p85 = scmp.ne.s32.totalorder %s73, %s74
      %p86 = scmp.eq.s32.totalorder %s22, 1
      %p87 = por %p85, %p86
      %p89 = scmp.ne.s32.totalorder %s74, %s88
      %p90 = scmp.eq.s32.totalorder %s22, 0
      %p91 = por %p89, %p90
      %s92 = ssub.s32 %s16, %s23
      %p93 = scmp.eq.s32.totalorder %s92, 0
      %s95 = sadd.s32 %s94, 1
      %s96 = scalar_select %p93, %s94, %s95
      %p99 = pneg %p93
      %p100 = scmp.eq.s32.totalorder %s16, 1
      %p101 = por %p99, %p100
      %p102 = scmp.ne.s32.totalorder %s94, %s97
      %p103 = scmp.eq.s32.totalorder %s16, 0
      %p104 = por %p102, %p103
      %p105 = scmp.ne.s32.totalorder %s94, %s97
      %p106 = scmp.eq.s32.totalorder %s21, 1
      %p107 = por %p105, %p106
      %p108 = scmp.ne.s32.totalorder %s97, %s98
      %p109 = scmp.eq.s32.totalorder %s21, 0
      %p110 = por %p108, %p109
      %p111 = scmp.ne.s32.totalorder %s97, %s98
      %p112 = scmp.eq.s32.totalorder %s22, 1
      %p113 = por %p111, %p112
      %p115 = scmp.ne.s32.totalorder %s98, %s114
      %p116 = scmp.eq.s32.totalorder %s22, 0
      %p117 = por %p115, %p116
      %p118 = scmp.le.s32.totalorder 1, %s16
      %p119 = scmp.lt.s32.totalorder %s16, 3
      %p120 = pnand %p118, %p119
      %p121 = pneg %p120
      // Predicated region
      $region9: #{tpu_custom_call.1} parent=5 // pred_check
        _
      $region10: #{tpu_custom_call.1} parent=5 // pred_check_branch
        %123 = sbr.rel (%p120) target = $region12
      $region11: #{tpu_custom_call.1} parent=5 // pred_region
        %s124 = ssub.s32 %s16, 1
        // Predicated region
        $region13: #{tpu_custom_call.1} parent=11 // pred_check
          %p125 = pneg %p63
        $region14: #{tpu_custom_call.1} parent=11 // pred_check_branch
          %127 = sbr.rel (%p125) target = $region16
        $region15: #{tpu_custom_call.1} parent=11 // pred_region
          %s129 = ssub.s32 256, 256
          %130 = vsyncadd [#allocation6], %s129
          %s131 = sshll.u32 [#allocation5], 4
          %s132 = int_to_ptr.vmem [resolvable:$true] %s131
          %137 = dma.hbm_to_vmem [thread:$0]  %s1, 256, %s132, [#allocation6], 128, 128, 8
        $region16: #{tpu_custom_call.1} parent=11 // pred_fallthru
          _
        // Predicated region
        $region17: #{tpu_custom_call.1} parent=11 // pred_check
          %p138 = pneg %p84
        $region18: #{tpu_custom_call.1} parent=11 // pred_check_branch
          %140 = sbr.rel (%p138) target = $region20
        $region19: #{tpu_custom_call.1} parent=11 // pred_region
          _
        $region20: #{tpu_custom_call.1} parent=11 // pred_fallthru
          _
      $region12: #{tpu_custom_call.1} parent=5 // pred_fallthru
        _
      %p141 = scmp.lt.s32.totalorder %s16, 2
      // Predicated region
      $region21: #{tpu_custom_call.1} parent=5 // pred_check
        %p142 = pneg %p141
      $region22: #{tpu_custom_call.1} parent=5 // pred_check_branch
        %144 = sbr.rel (%p142) target = $region24
      $region23: #{tpu_custom_call.1} parent=5 // pred_region
        // Predicated region
        $region25: #{tpu_custom_call.1} parent=23 // pred_check
          %p145 = pneg %p36
        $region26: #{tpu_custom_call.1} parent=23 // pred_check_branch
          %147 = sbr.rel (%p145) target = $region28
        $region27: #{tpu_custom_call.1} parent=23 // pred_region
          %s148 = sand.u32 %s26, 1
          %s149 = scalar_lea.sflag [#allocation3], %s148
          %s150 = sand.u32 %s26, 1
          %s151 = smul.addr %s150, 16
          %s152 = scalar_lea.vmem [#allocation2], %s151
          %s153 = smul.u32 2, %s16
          %s155 = ssub.s32 256, 256
          %156 = vsyncadd %s149, %s155
          %s157 = smul.addr %s153, 128
          %s158 = scalar_lea.hbm %s0, %s157
          %s159 = sshll.u32 %s152, 4
          %s160 = int_to_ptr.vmem [resolvable:$true] %s159
          %165 = dma.hbm_to_vmem [thread:$0]  %s158, 256, %s160, %s149, 128, 128, 8
        $region28: #{tpu_custom_call.1} parent=23 // pred_fallthru
          _
      $region24: #{tpu_custom_call.1} parent=5 // pred_fallthru
        _
      %p166 = scmp.le.s32.totalorder 1, %s16
      %p167 = scmp.lt.s32.totalorder %s16, 3
      %p168 = pnand %p166, %p167
      %p169 = pneg %p168
      // Predicated region
      $region29: #{tpu_custom_call.1} parent=5 // pred_check
        _
      $region30: #{tpu_custom_call.1} parent=5 // pred_check_branch
        %171 = sbr.rel (%p168) target = $region32
      $region31: #{tpu_custom_call.1} parent=5 // pred_region
        %s172 = ssub.s32 %s16, 1
        %s173 = sand.u32 %s29, 1
        %s174 = scalar_lea.sflag [#allocation3], %s173
        %s175 = sand.u32 %s29, 1
        %s176 = smul.addr %s175, 16
        %s177 = scalar_lea.vmem [#allocation2], %s176
        // Predicated region
        $region33: #{tpu_custom_call.1} parent=31 // pred_check
          %p178 = pneg %p42
        $region34: #{tpu_custom_call.1} parent=31 // pred_check_branch
          %180 = sbr.rel (%p178) target = $region36
        $region35: #{tpu_custom_call.1} parent=31 // pred_region
          %181 = dma.done %s174, 256
        $region36: #{tpu_custom_call.1} parent=31 // pred_fallthru
          _
        // Predicated region
        $region37: #{tpu_custom_call.1} parent=31 // pred_check
          %p182 = pneg %p63
        $region38: #{tpu_custom_call.1} parent=31 // pred_check_branch
          %184 = sbr.rel (%p182) target = $region40
        $region39: #{tpu_custom_call.1} parent=31 // pred_region
          %185 = dma.done [#allocation6], 256
        $region40: #{tpu_custom_call.1} parent=31 // pred_fallthru
          _
        %s186 = sand.u32 %s29, 1
        %s187 = scalar_lea.sflag [#allocation3], %s186
        %s188 = sand.u32 %s29, 1
        %s189 = smul.addr %s188, 16
        %s190 = scalar_lea.vmem [#allocation2], %s189
        %p191 = pneg %p42
        %p192 = pneg %p39
        %p193 = pneg %p63
        %p194 = pneg %p60
        %p195 = pneg %p84
        %p196 = pneg %p81
        %p197 = pneg %p110
        %p198 = pneg %p107
        %s199 = sand.u32 %s97, 1
        %s200 = scalar_lea.sflag [#allocation4], %s199
        %s201 = sand.u32 %s97, 1
        %s202 = smul.addr %s201, 16
        %s203 = scalar_lea.vmem [#allocation7], %s202
        %s204 = smul.u32 2, %s21
        %s205 = smul.u32 2, %s21
        %v206 = vld [vmem:[%s177] sm:$0xff]
        %v207 = vld [vmem:[%s177 + $0x8] sm:$0xff]
        %v208 = vld [vmem:[#allocation5] sm:$0xff]
        %v209 = vld [vmem:[#allocation5 + $0x8] sm:$0xff]
        %v210 = vld [vmem:[%s2] sm:$0x1]
        %v212 = vlaneseq
        %v213 = vshrl.u32 %v212, 7
        %v214 = vsub.s32 0, %v213
        %v215 = vrot.slane %v210, %v214
        %vm217 = vcmask 130048
        %v219 = vsel %vm217, %v206, 0
        %v222 = vsel %vm217, %v207, 0
        %224 = vmatprep.subr.mxu0 0.0
        %225 = vmatpush1.msra.mxu0 %v208
        %226 = vmatprep.subr.mxu0 0.0
        %227 = vmatpush1.msra.mxu0 %v209
        %228 = vmatprep.subr.mxu0 0.0
        %229 = vmatpush1.msra.mxu0 0.0
        %230 = vmatprep.subr.mxu0 0.0
        %231 = vmatpush1.msra.mxu0 0.0
        %232 = vmatprep.subr.mxu0 0.0
        %233 = vmatpush1.msra.mxu0 0.0
        %234 = vmatprep.subr.mxu0 0.0
        %235 = vmatpush1.msra.mxu0 0.0
        %236 = vmatprep.subr.mxu0 0.0
        %237 = vmatpush1.msra.mxu0 0.0
        %238 = vmatprep.subr.mxu0 0.0
        %239 = vmatpush1.msra.mxu0 0.0
        %240 = vmatprep.subr.mxu0 0.0
        %241 = vmatpush1.msra.mxu0 0.0
        %242 = vmatprep.subr.mxu0 0.0
        %243 = vmatpush1.msra.mxu0 0.0
        %244 = vmatprep.subr.mxu0 0.0
        %245 = vmatpush1.msra.mxu0 0.0
        %246 = vmatprep.subr.mxu0 0.0
        %247 = vmatpush1.msra.mxu0 0.0
        %248 = vmatprep.subr.mxu0 0.0
        %249 = vmatpush1.msra.mxu0 0.0
        %250 = vmatprep.subr.mxu0 0.0
        %251 = vmatpush1.msra.mxu0 0.0
        %252 = vmatprep.subr.mxu0 0.0
        %253 = vmatpush1.msra.mxu0 0.0
        %254 = vmatprep.subr.mxu0 0.0
        %255 = vmatpush1.msra.mxu0 0.0
        %256 = vmatprep.subr.mxu0 0.0
        %257 = vmatpush1.msra.mxu0 0.0
        %258 = vmatprep.subr.mxu0 0.0
        %259 = vmatpush1.msra.mxu0 0.0
        %260 = vmatprep.subr.mxu0 0.0
        %261 = vmatpush1.msra.mxu0 0.0
        %262 = vmatprep.subr.mxu0 0.0
        %263 = vmatpush1.msra.mxu0 0.0
        %264 = vmatprep.subr.mxu0 0.0
        %265 = vmatpush1.msra.mxu0 0.0
        %266 = vmatprep.subr.mxu0 0.0
        %267 = vmatpush1.msra.mxu0 0.0
        %268 = vmatprep.subr.mxu0 0.0
        %269 = vmatpush1.msra.mxu0 0.0
        %270 = vmatprep.subr.mxu0 0.0
        %271 = vmatpush1.msra.mxu0 0.0
        %272 = vmatprep.subr.mxu0 0.0
        %273 = vmatpush1.msra.mxu0 0.0
        %274 = vmatprep.subr.mxu0 0.0
        %275 = vmatpush1.msra.mxu0 0.0
        %276 = vmatprep.subr.mxu0 0.0
        %277 = vmatpush1.msra.mxu0 0.0
        %278 = vmatprep.subr.mxu0 0.0
        %279 = vmatpush1.msra.mxu0 0.0
        %280 = vmatprep.subr.mxu0 0.0
        %281 = vmatpush1.msra.mxu0 0.0
        %282 = vmatprep.subr.mxu0 0.0
        %283 = vmatpush1.msra.mxu0 0.0
        %284 = vmatprep.subr.mxu0 0.0
        %285 = vmatpush1.msra.mxu0 0.0
        %286 = vmatprep.subr.mxu0 0.0
        %287 = vmatpush1.msra.mxu0 0.0
        %288 = vmatprep.mubr.f32.mxu0 0.0
        %289 = vmatmul.mubr.f32.gmra.mrb[0].mxu0 %v219
        %v290 = vpop.f32.mrb[0].mxu0
        %v291 = vadd.f32 %v215, %v290
        %v292 = vpop.f32.mrb[0].mxu0
        %293 = vmatprep.mubr.f32.mxu0 0.0
        %294 = vmatmul.mubr.f32.gmra.mrb[0].mxu0 %v222
        %v295 = vpop.f32.mrb[0].mxu0
        %v296 = vadd.f32 %v215, %v295
        %v297 = vpop.f32.mrb[0].mxu0
        %298 = vdwg.mxu0
        %v299 = vmul.f32 %v291, %v291
        %v300 = vmul.f32 %v296, %v296
        %vm301 = vcmask 261120
        %v302 = vsel %vm301, %v299, 0.0
        %v303 = vrot.slane %v302, 4
        %v304 = vadd.f32 %v302, %v303
        %v305 = vrot.slane %v304, 2
        %v306 = vadd.f32 %v304, %v305
        %v307 = vrot.slane %v306, 1
        %v308 = vadd.f32 %v306, %v307
        %v309 = vsel %vm301, %v300, 0.0
        %v310 = vrot.slane %v309, 4
        %v311 = vadd.f32 %v309, %v310
        %v312 = vrot.slane %v311, 2
        %v313 = vadd.f32 %v311, %v312
        %v314 = vrot.slane %v313, 1
        %v315 = vadd.f32 %v313, %v314
        %v316 = vrsqrt.pop %v308
        %v317 = vrsqrt.pop %v315
        %v318 = vmul.f32 %v291, %v316
        %v319 = vmul.f32 %v296, %v317
        %320 = vst.msk [vmem:[%s203] sm:$0xff] %vm301, %v318
        %321 = vst.msk [vmem:[%s203 + $0x8] sm:$0xff] %vm301, %v319
        %s322 = sand.u32 %s97, 1
        %s323 = scalar_lea.sflag [#allocation4], %s322
        %s324 = sand.u32 %s97, 1
        %s325 = smul.addr %s324, 16
        %s326 = scalar_lea.vmem [#allocation7], %s325
        // Predicated region
        $region41: #{tpu_custom_call.1} parent=31 // pred_check
          %p327 = pneg %p107
        $region42: #{tpu_custom_call.1} parent=31 // pred_check_branch
          %329 = sbr.rel (%p327) target = $region44
        $region43: #{tpu_custom_call.1} parent=31 // pred_region
          %s330 = smul.u32 2, %s21
          %s332 = ssub.s32 256, 256
          %333 = vsyncadd %s323, %s332
          %s334 = smul.addr %s330, 128
          %s335 = scalar_lea.hbm %s3, %s334
          %s336 = sshll.u32 %s326, 4
          %s337 = int_to_ptr.vmem [resolvable:$true] %s336
          %342 = dma.vmem_to_hbm [thread:$0]  %s337, 256, %s335, %s323, 128, 128, 8
        $region44: #{tpu_custom_call.1} parent=31 // pred_fallthru
          _
      $region32: #{tpu_custom_call.1} parent=5 // pred_fallthru
        _
      %p343 = scmp.le.s32.totalorder 2, %s16
      // Predicated region
      $region45: #{tpu_custom_call.1} parent=5 // pred_check
        %p344 = pneg %p343
      $region46: #{tpu_custom_call.1} parent=5 // pred_check_branch
        %346 = sbr.rel (%p344) target = $region48
      $region47: #{tpu_custom_call.1} parent=5 // pred_region
        %s347 = ssub.s32 %s16, 2
        // Predicated region
        $region49: #{tpu_custom_call.1} parent=47 // pred_check
          %p348 = pneg %p113
        $region50: #{tpu_custom_call.1} parent=47 // pred_check_branch
          %350 = sbr.rel (%p348) target = $region52
        $region51: #{tpu_custom_call.1} parent=47 // pred_region
          %s351 = sand.u32 %s98, 1
          %s352 = scalar_lea.sflag [#allocation4], %s351
          %s353 = sand.u32 %s98, 1
          %s354 = smul.addr %s353, 16
          %s355 = scalar_lea.vmem [#allocation7], %s354
          %356 = dma.done %s352, 256
        $region52: #{tpu_custom_call.1} parent=47 // pred_fallthru
          _
      $region48: #{tpu_custom_call.1} parent=5 // pred_fallthru
        _
    $region6: #{tpu_custom_call.1} parent=1 // loop_footer
      %s20 = sadd.s32 1, %s16
    $region7: #{tpu_custom_call.1} parent=1 // loop_footer_branch
      %15 = sbr.rel target = $region3
    $region8: #{tpu_custom_call.1} parent=1 // loop_exit
      _
    %357 = vsyncpa [#allocation3], 1
    %s358 = scalar_lea.sflag [#allocation3], 1
    %359 = vsyncpa %s358, 1
    %360 = vsyncpa [#allocation6], 1
    %361 = vsyncpa [#allocation4], 1
    %s362 = scalar_lea.sflag [#allocation4], 1
    %363 = vsyncpa %s362, 1

</llo_original>
